<compile_context>
chip_gen: v6e
topology: v6e:2x2x1
jax: 0.10.0
libtpu: 0.0.40
codegen_flags: <defaults>
</compile_context>

<pallas_src>
import functools

import jax
import jax.numpy as jnp
from jax import lax
from jax.experimental import pallas as pl
from jax.experimental.pallas import tpu as pltpu


def _round_up(a: int, b: int) -> int:
    return ((a + b - 1) // b) * b


def _ffn_chunk(x_ref, w1_ref, b1_ref, w2_ref):
    """Per-d_ff-chunk work: relu(x @ W1_chunk^T + b1_chunk) @ W2_chunk^T  (f32)."""
    # First matmul: contract x's d_model with W1's d_model (native (d_ff, d_model)
    # layout -> no host-side transpose needed).
    h = lax.dot_general(x_ref[...], w1_ref[...],
                        dimension_numbers=(((1,), (1,)), ((), ())),
                        preferred_element_type=jnp.float32)
    h = jnp.maximum(h + b1_ref[...], 0.0)                  # bias + ReLU (per-chunk, exact)
    # Second matmul: contract the d_ff chunk of h with W2's d_ff columns (native
    # (d_model, d_ff) layout).  h is downcast to the weight dtype before the MXU
    # pass (standard practice; slightly less accurate than an f32 second pass).
    return lax.dot_general(h.astype(w2_ref.dtype), w2_ref[...],
                           dimension_numbers=(((1,), (1,)), ((), ())),
                           preferred_element_type=jnp.float32)


def _ffn_kernel_single(x_ref, w1_ref, b1_ref, w2_ref, b2_ref, o_ref):
    # Whole d_ff in one chunk: weight block indices never change, so W1/W2 stay
    # VMEM-resident across every M tile; no accumulator loop, no scratch.
    partial = _ffn_chunk(x_ref, w1_ref, b1_ref, w2_ref)
    o_ref[...] = (partial + b2_ref[...]).astype(o_ref.dtype)


def _ffn_kernel_multi(x_ref, w1_ref, b1_ref, w2_ref, b2_ref, o_ref, acc_ref):
    # d_ff is streamed in chunks along grid axis 1; acc_ref is a (tm, d_model) f32
    # accumulator that lives across the reduction axis.
    k = pl.program_id(1)

    @pl.when(k == 0)
    def _():
        acc_ref[...] = jnp.zeros_like(acc_ref)

    acc_ref[...] += _ffn_chunk(x_ref, w1_ref, b1_ref, w2_ref)

    @pl.when(k == pl.num_programs(1) - 1)
    def _():
        o_ref[...] = (acc_ref[...] + b2_ref[...]).astype(o_ref.dtype)


def _vmem_estimate(tm, tkf, d_model, x_isz, w_isz):
    """Rough double-buffered working-set size for the tile choice (bytes)."""
    x_buf = 2 * tm * d_model * x_isz          # double-buffered x tile
    out_buf = 2 * tm * d_model * x_isz        # double-buffered output tile
    acc = tm * d_model * 4                    # f32 accumulator scratch
    w1_buf = 2 * tkf * d_model * w_isz        # double-buffered W1 chunk
    w2_buf = 2 * d_model * tkf * w_isz        # double-buffered W2 chunk
    b_buf = 2 * (tkf + d_model) * 4
    h_tmp = tm * tkf * 4                      # f32 hidden intermediate
    return x_buf + out_buf + acc + w1_buf + w2_buf + b_buf + h_tmp


def position_wise_feed_forward(x, w1, b1, w2, b2, *, tm=None, tkf=None,
                               vmem_limit_bytes=None, cast_weights_to_bf16=False):
    """Fused y = fc2(relu(fc1(x))).

    x : (B, S, d_model)
    w1: (d_ff, d_model), b1: (d_ff,)   -- native PyTorch nn.Linear layout (out, in)
    w2: (d_model, d_ff), b2: (d_model,)

    Tile guidance (AI ~= tm flop/byte with bf16 weights):
      v6e : tm ~ 768-1024, tkf ~ 1024        (MXU crossover ~656 flop/B, 128 MiB VMEM)
      v7x : tm ~ 512,      tkf ~ 512-1024    (crossover ~311, only 64 MiB VMEM)
      v5e : tm >= 256 (bf16) / >= 512 (f32); prefer large tkf (1024-2048) to cut the
            accumulator RMW traffic on the single vector-store slot.
    Defaults auto-derive from the per-chip VMEM budget; pass tm/tkf to override.
    Set cast_weights_to_bf16=True on BW-starved chips (halves weight DMA bytes).
    """
    B, S, d_model = x.shape
    d_ff, d_model_w = w1.shape
    assert d_model_w == d_model and w2.shape == (d_model, d_ff)
    M = B * S

    if cast_weights_to_bf16:
        w1 = w1.astype(jnp.bfloat16)
        w2 = w2.astype(jnp.bfloat16)

    x_isz = jnp.dtype(x.dtype).itemsize
    w_isz = jnp.dtype(w1.dtype).itemsize

    # ---- per-chip VMEM budget (leave ~20% headroom for Mosaic internal scratch) ----
    if vmem_limit_bytes is None:
        try:
            phys = pltpu.get_tpu_info().vmem_capacity_bytes
        except Exception:
            phys = 64 * 1024 * 1024            # conservative fallback, fits every chip
        vmem_limit_bytes = int(phys * 0.8)     # ~51 MiB on v7x, ~102 MiB on v5e/v6e
    budget = int(vmem_limit_bytes * 0.9)       # extra margin for the fit check

    # ---- tile selection ----------------------------------------------------------
    # tkf: keep the whole d_ff in one chunk when W1+W2 fit in ~1/3 of the budget so
    # weights stay VMEM-resident across all M tiles; otherwise stream d_ff in large
    # chunks to amortize the f32 accumulator RMW and per-step grid overhead.
    weights_bytes = 2 * d_model * d_ff * w_isz
    if tkf is None:
        tkf = d_ff if weights_bytes <= budget // 3 else 1024
    else:
        tkf = max(128, _round_up(tkf, 128))

    # tm: biggest token tile the budget allows (the arithmetic-intensity knob).
    if tm is None:
        tm = 1024
    else:
        tm = max(8, _round_up(tm, 8))
    tm_eff = min(tm, _round_up(M, 8))          # don't over-tile tiny inputs

    # Shrink (tm, tkf) until the double-buffered working set fits VMEM.
    # 256-alignment matches the v6e/v7x 2x256^2 MXU (128 suffices on v5e).
    while (_vmem_estimate(tm_eff, min(tkf, d_ff), d_model, x_isz, w_isz) > budget
           and (tm_eff > 256 or tkf > 256)):
        if tm_eff >= tkf and tm_eff > 256:
            tm_eff = max(256, _round_up(tm_eff // 2, 256))
        elif tkf > 256:
            tkf = max(256, _round_up(tkf // 2, 256))
        else:
            tm_eff = max(256, _round_up(tm_eff // 2, 256))

    if tkf >= d_ff:
        tkf_eff, d_ff_pad = d_ff, d_ff         # block == full dim: always legal
    else:
        tkf_eff = tkf                          # multiple of 128 -> legal lane block
        d_ff_pad = _round_up(d_ff, tkf_eff)

    M_pad = _round_up(M, tm_eff)

    # ---- host-side prep (biases only; weights stay in native layout) -------------
    x2d = x.reshape(M, d_model)
    if M_pad != M:
        x2d = jnp.pad(x2d, ((0, M_pad - M), (0, 0)))   # padded rows sliced off below

    b1_2d = b1.astype(jnp.float32).reshape(1, d_ff)
    b2_2d = b2.astype(jnp.float32).reshape(1, d_model)
    if d_ff_pad != d_ff:
        # Zero-padded d_ff rows/cols contribute exactly 0: relu(0 + 0) @ 0 == 0.
        # TODO(synk): pad the weights once at parameter init instead of per call.
        pad = d_ff_pad - d_ff
        w1 = jnp.pad(w1, ((0, pad), (0, 0)))
        w2 = jnp.pad(w2, ((0, 0), (0, pad)))
        b1_2d = jnp.pad(b1_2d, ((0, 0), (0, pad)))

    n_k = d_ff_pad // tkf_eff
    grid = (M_pad // tm_eff, n_k)

    in_specs = [
        pl.BlockSpec((tm_eff, d_model), lambda i, k: (i, 0)),    # x tile (fixed over k)
        pl.BlockSpec((tkf_eff, d_model), lambda i, k: (k, 0)),   # W1 chunk, native layout
        pl.BlockSpec((1, tkf_eff), lambda i, k: (0, k)),         # b1 chunk (f32)
        pl.BlockSpec((d_model, tkf_eff), lambda i, k: (0, k)),   # W2 chunk, native layout
        pl.BlockSpec((1, d_model), lambda i, k: (0, 0)),         # b2 (f32)
    ]
    out_spec = pl.BlockSpec((tm_eff, d_model), lambda i, k: (i, 0))

    if n_k == 1:
        kernel = _ffn_kernel_single
        scratch = ()                                              # no accumulator needed
    else:
        kernel = _ffn_kernel_multi
        scratch = (pltpu.VMEM((tm_eff, d_model), jnp.float32),)   # f32 accumulator

    out = pl.pallas_call(
        kernel,
        out_shape=jax.ShapeDtypeStruct((M_pad, d_model), x.dtype),
        grid_spec=pltpu.PrefetchScalarGridSpec(
            num_scalar_prefetch=0,
            grid=grid,                                            # (M tiles, d_ff chunks)
            in_specs=in_specs,
            out_specs=out_spec,
            scratch_shapes=scratch,
        ),
        compiler_params=pltpu.CompilerParams(
            # M tiles shard across TensorCores (v7x megacore); d_ff is the reduction.
            dimension_semantics=("parallel", "arbitrary"),
            vmem_limit_bytes=vmem_limit_bytes,
        ),
    )(x2d, w1, b1_2d, w2, b2_2d)

    return out[:M].reshape(B, S, d_model)


def _init_linear(key, out_features, in_features, dtype=jnp.float32):
    # Deterministic init mirroring torch.nn.Linear default: U(-1/sqrt(fan_in), 1/sqrt(fan_in))
    kw, kb = jax.random.split(key)
    bound = 1.0 / (in_features ** 0.5)
    w = jax.random.uniform(kw, (out_features, in_features), dtype, -bound, bound)
    b = jax.random.uniform(kb, (out_features,), dtype, -bound, bound)
    return w, b


def _reference(x, w1, b1, w2, b2):
    h = jnp.maximum(x @ w1.T + b1, 0.0)
    return h @ w2.T + b2


if __name__ == "__main__":
    key = jax.random.PRNGKey(0)

    # Case 1: explicit small tiles -> exercises both grid axes and the multi-chunk
    # accumulator kernel (2 token tiles x 2 d_ff reduction chunks).
    B, S, d_model, d_ff = 2, 8, 128, 512
    kx, k1, k2, key = jax.random.split(key, 4)
    x = jax.random.normal(kx, (B, S, d_model), jnp.float32)
    w1, b1 = _init_linear(k1, d_ff, d_model)
    w2, b2 = _init_linear(k2, d_model, d_ff)
    y = jax.block_until_ready(position_wise_feed_forward(x, w1, b1, w2, b2, tm=8, tkf=256))
    y_ref = _reference(x, w1, b1, w2, b2)
    assert y.shape == (B, S, d_model)
    assert jnp.allclose(y, y_ref, atol=5e-3, rtol=5e-3), "mismatch vs reference (case 1)"

    # Case 2: ragged token count + auto tiles -> M-padding path, weight-resident
    # single-chunk kernel (whole W1/W2 fit in VMEM).
    B, S, d_model, d_ff = 2, 5, 32, 64
    kx, k1, k2, key = jax.random.split(key, 4)
    x = jax.random.normal(kx, (B, S, d_model), jnp.float32)
    w1, b1 = _init_linear(k1, d_ff, d_model)
    w2, b2 = _init_linear(k2, d_model, d_ff)
    y = jax.block_until_ready(position_wise_feed_forward(x, w1, b1, w2, b2))
    y_ref = _reference(x, w1, b1, w2, b2)
    assert y.shape == (B, S, d_model)
    assert jnp.allclose(y, y_ref, atol=5e-3, rtol=5e-3), "mismatch vs reference (case 2)"

    # Case 3: d_ff not a multiple of the chunk -> d_ff zero-padding path.
    B, S, d_model, d_ff = 2, 8, 128, 320
    kx, k1, k2, key = jax.random.split(key, 4)
    x = jax.random.normal(kx, (B, S, d_model), jnp.float32)
    w1, b1 = _init_linear(k1, d_ff, d_model)
    w2, b2 = _init_linear(k2, d_model, d_ff)
    y = jax.block_until_ready(position_wise_feed_forward(x, w1, b1, w2, b2, tkf=256))
    y_ref = _reference(x, w1, b1, w2, b2)
    assert y.shape == (B, S, d_model)
    assert jnp.allclose(y, y_ref, atol=5e-3, rtol=5e-3), "mismatch vs reference (case 3)"

    print("KERNEL_OK")
</pallas_src>

<mosaic_0001>
module attributes {stable_mosaic.version = 11 : i64} {
  func.func @_ffn_kernel_multi(%arg0: i32, %arg1: i32, %arg2: memref<8x128xf32, #tpu.memory_space<vmem>>, %arg3: memref<256x128xf32, #tpu.memory_space<vmem>>, %arg4: memref<1x256xf32, #tpu.memory_space<vmem>>, %arg5: memref<128x256xf32, #tpu.memory_space<vmem>>, %arg6: memref<1x128xf32, #tpu.memory_space<vmem>>, %arg7: memref<8x128xf32, #tpu.memory_space<vmem>>, %arg8: memref<8x128xf32, #tpu.memory_space<vmem>>) attributes {dimension_semantics = [#tpu.dimension_semantics<parallel>, #tpu.dimension_semantics<arbitrary>], iteration_bounds = array<i64: 2, 2>, scalar_prefetch = 0 : i64, scratch_operands = 1 : i64, tpu.core_type = #tpu.core_type<tc>, window_params = [{transform_indices = @transform_0, window_bounds = array<i64: 8, 128>}, {transform_indices = @transform_1, window_bounds = array<i64: 256, 128>}, {transform_indices = @transform_2, window_bounds = array<i64: 1, 256>}, {transform_indices = @transform_3, window_bounds = array<i64: 128, 256>}, {pipeline_mode = #tpu.pipeline_mode<synchronous>, transform_indices = @transform_4, window_bounds = array<i64: 1, 128>}, {transform_indices = @transform_5, window_bounds = array<i64: 8, 128>}]} {
    %c0_i32 = arith.constant 0 : i32
    %0 = arith.cmpi eq, %arg1, %c0_i32 : i32
    %1 = arith.extui %0 : i1 to i32
    %c0_i32_0 = arith.constant 0 : i32
    %2 = arith.cmpi ne, %1, %c0_i32_0 : i32
    scf.if %2 {
      %cst_15 = arith.constant 0.000000e+00 : f32
      %19 = vector.broadcast %cst_15 : f32 to vector<8x128xf32>
      %c0_16 = arith.constant 0 : index
      %c0_17 = arith.constant 0 : index
      %20 = vector.load %arg8[%c0_16, %c0_17] : memref<8x128xf32, #tpu.memory_space<vmem>>, vector<8x128xf32>
      tpu.vector_store %arg8[%c0_16, %c0_17], %19 {strides = array<i32>} : memref<8x128xf32, #tpu.memory_space<vmem>>, vector<8x128xf32>,
    } else {
    }
    %c0 = arith.constant 0 : index
    %c0_1 = arith.constant 0 : index
    %3 = vector.load %arg8[%c0, %c0_1] : memref<8x128xf32, #tpu.memory_space<vmem>>, vector<8x128xf32>
    %c0_2 = arith.constant 0 : index
    %c0_3 = arith.constant 0 : index
    %4 = vector.load %arg2[%c0_2, %c0_3] : memref<8x128xf32, #tpu.memory_space<vmem>>, vector<8x128xf32>
    %c0_4 = arith.constant 0 : index
    %c0_5 = arith.constant 0 : index
    %5 = vector.load %arg3[%c0_4, %c0_5] : memref<256x128xf32, #tpu.memory_space<vmem>>, vector<256x128xf32>
    %cst = arith.constant dense<0.000000e+00> : vector<8x256xf32>
    %6 = tpu.matmul %4, %5, %cst {dimension_numbers = #tpu.dot_dimension_numbers<[1], [1], [0], [0], [0, 0, 1, 0], [], []>} : vector<8x128xf32>, vector<256x128xf32>, vector<8x256xf32> -> vector<8x256xf32>
    %c0_6 = arith.constant 0 : index
    %c0_7 = arith.constant 0 : index
    %7 = vector.load %arg4[%c0_6, %c0_7] : memref<1x256xf32, #tpu.memory_space<vmem>>, vector<1x256xf32>
    %8 = vector.broadcast %7 : vector<1x256xf32> to vector<8x256xf32>
    %9 = arith.addf %6, %8 : vector<8x256xf32>
    %cst_8 = arith.constant 0.000000e+00 : f32
    %10 = vector.broadcast %cst_8 : f32 to vector<8x256xf32>
    %11 = arith.maximumf %9, %10 : vector<8x256xf32>
    %c0_9 = arith.constant 0 : index
    %c0_10 = arith.constant 0 : index
    %12 = vector.load %arg5[%c0_9, %c0_10] : memref<128x256xf32, #tpu.memory_space<vmem>>, vector<128x256xf32>
    %cst_11 = arith.constant dense<0.000000e+00> : vector<8x128xf32>
    %13 = tpu.matmul %11, %12, %cst_11 {dimension_numbers = #tpu.dot_dimension_numbers<[1], [1], [0], [0], [0, 0, 1, 0], [], []>} : vector<8x256xf32>, vector<128x256xf32>, vector<8x128xf32> -> vector<8x128xf32>
    %14 = arith.addf %3, %13 : vector<8x128xf32>
    %c0_12 = arith.constant 0 : index
    %c0_13 = arith.constant 0 : index
    %15 = vector.load %arg8[%c0_12, %c0_13] : memref<8x128xf32, #tpu.memory_space<vmem>>, vector<8x128xf32>
    tpu.vector_store %arg8[%c0_12, %c0_13], %14 {strides = array<i32>} : memref<8x128xf32, #tpu.memory_space<vmem>>, vector<8x128xf32>,
    %c1_i32 = arith.constant 1 : i32
    %16 = arith.cmpi eq, %arg1, %c1_i32 : i32
    %17 = arith.extui %16 : i1 to i32
    %c0_i32_14 = arith.constant 0 : i32
    %18 = arith.cmpi ne, %17, %c0_i32_14 : i32
    scf.if %18 {
      %c0_15 = arith.constant 0 : index
      %c0_16 = arith.constant 0 : index
      %19 = vector.load %arg8[%c0_15, %c0_16] : memref<8x128xf32, #tpu.memory_space<vmem>>, vector<8x128xf32>
      %c0_17 = arith.constant 0 : index
      %c0_18 = arith.constant 0 : index
      %20 = vector.load %arg6[%c0_17, %c0_18] : memref<1x128xf32, #tpu.memory_space<vmem>>, vector<1x128xf32>
      %21 = vector.broadcast %20 : vector<1x128xf32> to vector<8x128xf32>
      %22 = arith.addf %19, %21 : vector<8x128xf32>
      %c0_19 = arith.constant 0 : index
      %c0_20 = arith.constant 0 : index
      %23 = vector.load %arg7[%c0_19, %c0_20] : memref<8x128xf32, #tpu.memory_space<vmem>>, vector<8x128xf32>
      tpu.vector_store %arg7[%c0_19, %c0_20], %22 {strides = array<i32>} : memref<8x128xf32, #tpu.memory_space<vmem>>, vector<8x128xf32>,
    } else {
    }
    return
  }
  func.func @transform_0(%arg0: i32, %arg1: i32) -> (i32, i32) {
    %c0_i32 = arith.constant 0 : i32
    %c0_i32_0 = arith.constant 0 : i32
    return %arg0, %c0_i32 : i32, i32
  }
  func.func @transform_1(%arg0: i32, %arg1: i32) -> (i32, i32) {
    %c0_i32 = arith.constant 0 : i32
    %c0_i32_0 = arith.constant 0 : i32
    return %arg1, %c0_i32 : i32, i32
  }
  func.func @transform_2(%arg0: i32, %arg1: i32) -> (i32, i32) {
    %c0_i32 = arith.constant 0 : i32
    %c0_i32_0 = arith.constant 0 : i32
    return %c0_i32, %arg1 : i32, i32
  }
  func.func @transform_3(%arg0: i32, %arg1: i32) -> (i32, i32) {
    %c0_i32 = arith.constant 0 : i32
    %c0_i32_0 = arith.constant 0 : i32
    return %c0_i32, %arg1 : i32, i32
  }
  func.func @transform_4(%arg0: i32, %arg1: i32) -> (i32, i32) {
    %c0_i32 = arith.constant 0 : i32
    %c0_i32_0 = arith.constant 0 : i32
    %c0_i32_1 = arith.constant 0 : i32
    return %c0_i32, %c0_i32_0 : i32, i32
  }
  func.func @transform_5(%arg0: i32, %arg1: i32) -> (i32, i32) {
    %c0_i32 = arith.constant 0 : i32
    %c0_i32_0 = arith.constant 0 : i32
    return %arg0, %c0_i32 : i32, i32
  }
}

</mosaic_0001>

<llo_original>
// kernel: tpu_custom_call.1
$region0: #{tpu_custom_call.1}
  #allocation0 [shape = 'u32[]', space=smem, size = 0x4, offset = 0x4, fixed_abs, tag = 'smem constant byte address 0x4 - core index']
  #allocation1 [shape = 'u32[144,128]{1,0:T(1,128)}', space=vmem, size = 0x12000, scoped, tag = 'internal scratch']
  #allocation2 [shape = 'f32[8,128]{1,0:T(8,128)}', space=vmem, size = 0x1000, scoped, tag = 'scratch operand']
  %s0 = inlined_call_operand.hbm [shape: f32[16,128], index: 0, kind: input, shape index: {}]
  %s1 = inlined_call_operand.hbm [shape: f32[512,128], index: 1, kind: input, shape index: {}]
  %s2 = inlined_call_operand.hbm [shape: f32[1,512], index: 2, kind: input, shape index: {}]
  %s3 = inlined_call_operand.hbm [shape: f32[128,512], index: 3, kind: input, shape index: {}]
  %s4 = inlined_call_operand.vmem [shape: f32[1,128], index: 4, kind: input, shape index: {}]
  %s5 = inlined_call_operand.hbm [shape: f32[16,128], index: 5, kind: output, shape index: {}]
  %s6 = sld [smem:[#allocation0]]
  $region77: #{tpu_custom_call.1} parent=0
    _
  %s8 = ssub.s32 1, %s6
  %s9 = scalar_select 0, %s8, %s6
  $region1: #{tpu_custom_call.1} parent=0
    #allocation3 [shape = 'u8[8192]{0}', space=vmem, size = 0x2000, scoped, tag = 'input window, operand 0']
    #allocation4 [shape = 's32[2]{0}', space=sflag, size = 0x8, scoped, tag = 'scoped memory for tpu_custom_call.1']
    #allocation5 [shape = 's32[2]{0}', space=sflag, size = 0x8, scoped, tag = 'scoped memory for tpu_custom_call.1']
    #allocation6 [shape = 'u8[262144]{0}', space=vmem, size = 0x40000, scoped, tag = 'input window, operand 1']
    #allocation7 [shape = 's32[2]{0}', space=sflag, size = 0x8, scoped, tag = 'scoped memory for tpu_custom_call.1']
    #allocation8 [shape = 'u8[2048]{0}', space=vmem, size = 0x800, scoped, tag = 'input window, operand 2']
    #allocation9 [shape = 'u8[262144]{0}', space=vmem, size = 0x40000, scoped, tag = 'input window, operand 3']
    #allocation10 [shape = 's32[2]{0}', space=sflag, size = 0x8, scoped, tag = 'scoped memory for tpu_custom_call.1']
    #allocation11 [shape = 'u8[8192]{0}', space=vmem, size = 0x2000, scoped, tag = 'output window, operand 0']
    %10 = vsyncpa [#allocation4], 0
    %s11 = scalar_lea.sflag [#allocation4], 1
    %12 = vsyncpa %s11, 0
    %13 = vsyncpa [#allocation7], 0
    %s14 = scalar_lea.sflag [#allocation7], 1
    %15 = vsyncpa %s14, 0
    %16 = vsyncpa [#allocation10], 0
    %s17 = scalar_lea.sflag [#allocation10], 1
    %18 = vsyncpa %s17, 0
    %19 = vsyncpa [#allocation5], 0
    %s20 = scalar_lea.sflag [#allocation5], 1
    %21 = vsyncpa %s20, 0
    loop: start=0, step=1, limit=6
    $region2: #{tpu_custom_call.1} parent=1 // loop_pre_header
      _
    $region3: #{tpu_custom_call.1} parent=1 // loop_header
      %s23 = sphi 0, %s27
      %p24 = scmp.ge.s32.totalorder %s23, 6
      %s30 = sphi 0, %s42
      %s31 = sphi 0, %s38
      %s32 = sphi 0, %s30
      %s33 = sphi 0, %s31
      %s34 = sphi 0, %s32
      %s35 = sphi 0, %s33
      %s45 = sphi 0, %s47
      %s48 = sphi 0, %s45
      %s49 = sphi 0, %s48
      %s65 = sphi 0, %s49
      %s71 = sphi 0, %s73
      %s74 = sphi 0, %s71
      %s75 = sphi 0, %s74
      %s91 = sphi 0, %s75
      %s97 = sphi 0, %s99
      %s100 = sphi 0, %s97
      %s101 = sphi 0, %s100
      %s117 = sphi 0, %s101
      %s123 = sphi 0, %s125
      %s126 = sphi 0, %s123
      %s127 = sphi 0, %s126
      %s143 = sphi 0, %s127
      %s147 = sphi 0, %s147
      %s149 = sphi 0, %s147
      %s150 = sphi 0, %s149
      %s164 = sphi 0, %s150
      %s170 = sphi 0, %s172
      %s173 = sphi 0, %s170
      %s174 = sphi 0, %s173
      %s190 = sphi 0, %s174
    $region4: #{tpu_custom_call.1} parent=1 // loop_header_branch
      %26 = sbr.rel (%p24) target = $region8
    $region5: #{tpu_custom_call.1} parent=1 // loop_body
      %s28 = ssub.s32 %s23, 1
      %s29 = ssub.s32 %s23, 2
      %s36 = sadd.s32 1, %s31
      %p37 = scmp.ge.s32.totalorder %s36, 2
      %s38 = scalar_select %p37, 0, %s36
      %s39 = sadd.s32 1, %s30
      %s40 = scalar_select %p37, %s39, %s30
      %p41 = scmp.ge.s32.totalorder %s40, 2
      %s42 = scalar_select %p41, 0, %s40
      %s43 = ssub.s32 %s30, %s42
      %p44 = scmp.eq.s32.totalorder %s43, 0
      %s46 = sadd.s32 %s45, 1
      %s47 = scalar_select %p44, %s45, %s46
      %p50 = pneg %p44
      %p51 = scmp.eq.s32.totalorder %s23, 3
      %p52 = por %p50, %p51
      %p53 = scmp.ne.s32.totalorder %s45, %s48
      %p54 = scmp.eq.s32.totalorder %s23, 0
      %p55 = por %p53, %p54
      %p56 = scmp.ne.s32.totalorder %s45, %s48
      %p57 = scmp.eq.s32.totalorder %s28, 3
      %p58 = por %p56, %p57
      %p59 = scmp.ne.s32.totalorder %s48, %s49
      %p60 = scmp.eq.s32.totalorder %s28, 0
      %p61 = por %p59, %p60
      %p62 = scmp.ne.s32.totalorder %s48, %s49
      %p63 = scmp.eq.s32.totalorder %s29, 3
      %p64 = por %p62, %p63
      %p66 = scmp.ne.s32.totalorder %s49, %s65
      %p67 = scmp.eq.s32.totalorder %s29, 0
      %p68 = por %p66, %p67
      %s69 = ssub.s32 %s31, %s38
      %p70 = scmp.eq.s32.totalorder %s69, 0
      %s72 = sadd.s32 %s71, 1
      %s73 = scalar_select %p70, %s71, %s72
      %p76 = pneg %p70
      %p77 = scmp.eq.s32.totalorder %s23, 3
      %p78 = por %p76, %p77
      %p79 = scmp.ne.s32.totalorder %s71, %s74
      %p80 = scmp.eq.s32.totalorder %s23, 0
      %p81 = por %p79, %p80
      %p82 = scmp.ne.s32.totalorder %s71, %s74
      %p83 = scmp.eq.s32.totalorder %s28, 3
      %p84 = por %p82, %p83
      %p85 = scmp.ne.s32.totalorder %s74, %s75
      %p86 = scmp.eq.s32.totalorder %s28, 0
      %p87 = por %p85, %p86
      %p88 = scmp.ne.s32.totalorder %s74, %s75
      %p89 = scmp.eq.s32.totalorder %s29, 3
      %p90 = por %p88, %p89
      %p92 = scmp.ne.s32.totalorder %s75, %s91
      %p93 = scmp.eq.s32.totalorder %s29, 0
      %p94 = por %p92, %p93
      %s95 = ssub.s32 %s31, %s38
      %p96 = scmp.eq.s32.totalorder %s95, 0
      %s98 = sadd.s32 %s97, 1
      %s99 = scalar_select %p96, %s97, %s98
      %p102 = pneg %p96
      %p103 = scmp.eq.s32.totalorder %s23, 3
      %p104 = por %p102, %p103
      %p105 = scmp.ne.s32.totalorder %s97, %s100
      %p106 = scmp.eq.s32.totalorder %s23, 0
      %p107 = por %p105, %p106
      %p108 = scmp.ne.s32.totalorder %s97, %s100
      %p109 = scmp.eq.s32.totalorder %s28, 3
      %p110 = por %p108, %p109
      %p111 = scmp.ne.s32.totalorder %s100, %s101
      %p112 = scmp.eq.s32.totalorder %s28, 0
      %p113 = por %p111, %p112
      %p114 = scmp.ne.s32.totalorder %s100, %s101
      %p115 = scmp.eq.s32.totalorder %s29, 3
      %p116 = por %p114, %p115
      %p118 = scmp.ne.s32.totalorder %s101, %s117
      %p119 = scmp.eq.s32.totalorder %s29, 0
      %p120 = por %p118, %p119
      %s121 = ssub.s32 %s31, %s38
      %p122 = scmp.eq.s32.totalorder %s121, 0
      %s124 = sadd.s32 %s123, 1
      %s125 = scalar_select %p122, %s123, %s124
      %p128 = pneg %p122
      %p129 = scmp.eq.s32.totalorder %s23, 3
      %p130 = por %p128, %p129
      %p131 = scmp.ne.s32.totalorder %s123, %s126
      %p132 = scmp.eq.s32.totalorder %s23, 0
      %p133 = por %p131, %p132
      %p134 = scmp.ne.s32.totalorder %s123, %s126
      %p135 = scmp.eq.s32.totalorder %s28, 3
      %p136 = por %p134, %p135
      %p137 = scmp.ne.s32.totalorder %s126, %s127
      %p138 = scmp.eq.s32.totalorder %s28, 0
      %p139 = por %p137, %p138
      %p140 = scmp.ne.s32.totalorder %s126, %s127
      %p141 = scmp.eq.s32.totalorder %s29, 3
      %p142 = por %p140, %p141
      %p144 = scmp.ne.s32.totalorder %s127, %s143
      %p145 = scmp.eq.s32.totalorder %s29, 0
      %p146 = por %p144, %p145
      %s148 = sadd.s32 %s147, 1
      %p151 = scmp.eq.s32.totalorder %s23, 3
      %p152 = scmp.ne.s32.totalorder %s147, %s149
      %p153 = scmp.eq.s32.totalorder %s23, 0
      %p154 = por %p152, %p153
      %p155 = scmp.ne.s32.totalorder %s147, %s149
      %p156 = scmp.eq.s32.totalorder %s28, 3
      %p157 = por %p155, %p156
      %p158 = scmp.ne.s32.totalorder %s149, %s150
      %p159 = scmp.eq.s32.totalorder %s28, 0
      %p160 = por %p158, %p159
      %p161 = scmp.ne.s32.totalorder %s149, %s150
      %p162 = scmp.eq.s32.totalorder %s29, 3
      %p163 = por %p161, %p162
      %p165 = scmp.ne.s32.totalorder %s150, %s164
      %p166 = scmp.eq.s32.totalorder %s29, 0
      %p167 = por %p165, %p166
      %s168 = ssub.s32 %s30, %s42
      %p169 = scmp.eq.s32.totalorder %s168, 0
      %s171 = sadd.s32 %s170, 1
      %s172 = scalar_select %p169, %s170, %s171
      %p175 = pneg %p169
      %p176 = scmp.eq.s32.totalorder %s23, 3
      %p177 = por %p175, %p176
      %p178 = scmp.ne.s32.totalorder %s170, %s173
      %p179 = scmp.eq.s32.totalorder %s23, 0
      %p180 = por %p178, %p179
      %p181 = scmp.ne.s32.totalorder %s170, %s173
      %p182 = scmp.eq.s32.totalorder %s28, 3
      %p183 = por %p181, %p182
      %p184 = scmp.ne.s32.totalorder %s173, %s174
      %p185 = scmp.eq.s32.totalorder %s28, 0
      %p186 = por %p184, %p185
      %p187 = scmp.ne.s32.totalorder %s173, %s174
      %p188 = scmp.eq.s32.totalorder %s29, 3
      %p189 = por %p187, %p188
      %p191 = scmp.ne.s32.totalorder %s174, %s190
      %p192 = scmp.eq.s32.totalorder %s29, 0
      %p193 = por %p191, %p192
      %p194 = scmp.le.s32.totalorder 1, %s23
      %p195 = scmp.lt.s32.totalorder %s23, 5
      %p196 = pnand %p194, %p195
      %p197 = pneg %p196
      // Predicated region
      $region9: #{tpu_custom_call.1} parent=5 // pred_check
        _
      $region10: #{tpu_custom_call.1} parent=5 // pred_check_branch
        %199 = sbr.rel (%p196) target = $region12
      $region11: #{tpu_custom_call.1} parent=5 // pred_region
        %s200 = ssub.s32 %s23, 1
        // Predicated region
        $region13: #{tpu_custom_call.1} parent=11 // pred_check
          %p201 = pneg %p160
        $region14: #{tpu_custom_call.1} parent=11 // pred_check_branch
          %203 = sbr.rel (%p201) target = $region16
        $region15: #{tpu_custom_call.1} parent=11 // pred_region
          _
        $region16: #{tpu_custom_call.1} parent=11 // pred_fallthru
          _
      $region12: #{tpu_custom_call.1} parent=5 // pred_fallthru
        _
      %p204 = scmp.lt.s32.totalorder %s23, 4
      // Predicated region
      $region17: #{tpu_custom_call.1} parent=5 // pred_check
        %p205 = pneg %p204
      $region18: #{tpu_custom_call.1} parent=5 // pred_check_branch
        %207 = sbr.rel (%p205) target = $region20
      $region19: #{tpu_custom_call.1} parent=5 // pred_region
        // Predicated region
        $region21: #{tpu_custom_call.1} parent=19 // pred_check
          %p208 = pneg %p55
        $region22: #{tpu_custom_call.1} parent=19 // pred_check_branch
          %210 = sbr.rel (%p208) target = $region24
        $region23: #{tpu_custom_call.1} parent=19 // pred_region
          %s211 = sand.u32 %s45, 1
          %s212 = scalar_lea.sflag [#allocation4], %s211
          %s213 = sand.u32 %s45, 1
          %s214 = smul.addr %s213, 8
          %s215 = scalar_lea.vmem [#allocation3], %s214
          %s217 = ssub.s32 128, 128
          %218 = vsyncadd %s212, %s217
          %s219 = smul.addr %s30, 128
          %s220 = scalar_lea.hbm %s0, %s219
          %s222 = sshll.u32 %s215, 4
          %s223 = int_to_ptr.vmem [resolvable:$true] %s222
          %225 = dma.hbm_to_vmem [thread:$0]  %s220, 128, %s223, %s212
        $region24: #{tpu_custom_call.1} parent=19 // pred_fallthru
          _
        // Predicated region
        $region25: #{tpu_custom_call.1} parent=19 // pred_check
          %p226 = pneg %p81
        $region26: #{tpu_custom_call.1} parent=19 // pred_check_branch
          %228 = sbr.rel (%p226) target = $region28
        $region27: #{tpu_custom_call.1} parent=19 // pred_region
          %s229 = sand.u32 %s23, 1
          %s230 = scalar_lea.sflag [#allocation7], %s229
          %s231 = sand.u32 %s71, 1
          %s232 = smul.addr %s231, 256
          %s233 = scalar_lea.vmem [#allocation6], %s232
          %s234 = smul.u32 32, %s31
          %s236 = ssub.s32 4096, 4096
          %237 = vsyncadd %s230, %s236
          %s238 = smul.addr %s234, 128
          %s239 = scalar_lea.hbm %s1, %s238
          %s240 = sshll.u32 %s233, 4
          %s241 = int_to_ptr.vmem [resolvable:$true] %s240
          %246 = dma.hbm_to_vmem [thread:$0]  %s239, 4096, %s241, %s230, 128, 128, 8
        $region28: #{tpu_custom_call.1} parent=19 // pred_fallthru
          _
        // Predicated region
        $region29: #{tpu_custom_call.1} parent=19 // pred_check
          %p247 = pneg %p107
        $region30: #{tpu_custom_call.1} parent=19 // pred_check_branch
          %249 = sbr.rel (%p247) target = $region32
        $region31: #{tpu_custom_call.1} parent=19 // pred_region
          %s250 = sand.u32 %s23, 1
          %s251 = scalar_lea.sflag [#allocation7], %s250
          %s252 = sand.u32 %s97, 1
          %s253 = smul.addr %s252, 2
          %s254 = scalar_lea.vmem [#allocation8], %s253
          %s255 = smul.u32 2, %s31
          %s257 = ssub.s32 32, 32
          %258 = vsyncadd %s251, %s257
          %s259 = smul.addr %s255, 16
          %s260 = scalar_lea.hbm %s2, %s259
          %s262 = sshll.u32 %s254, 4
          %s263 = int_to_ptr.vmem [resolvable:$true] %s262
          %265 = dma.hbm_to_vmem [thread:$0]  %s260, 32, %s263, %s251
        $region32: #{tpu_custom_call.1} parent=19 // pred_fallthru
          _
        // Predicated region
        $region33: #{tpu_custom_call.1} parent=19 // pred_check
          %p266 = pneg %p133
        $region34: #{tpu_custom_call.1} parent=19 // pred_check_branch
          %268 = sbr.rel (%p266) target = $region36
        $region35: #{tpu_custom_call.1} parent=19 // pred_region
          %s269 = sand.u32 %s123, 1
          %s270 = scalar_lea.sflag [#allocation10], %s269
          %s271 = sand.u32 %s123, 1
          %s272 = smul.addr %s271, 256
          %s273 = scalar_lea.vmem [#allocation9], %s272
          %s274 = smul.u32 2, %s31
          %s276 = ssub.s32 4096, 4096
          %277 = vsyncadd %s270, %s276
          %s278 = smul.addr %s274, 128
          %s279 = scalar_lea.hbm %s3, %s278
          %s280 = sshll.u32 %s273, 4
          %s281 = int_to_ptr.vmem [resolvable:$true] %s280
          %286 = dma.hbm_to_vmem [thread:$0]  %s279, 4096, %s281, %s270, 512, 256, 16
        $region36: #{tpu_custom_call.1} parent=19 // pred_fallthru
          _
      $region20: #{tpu_custom_call.1} parent=5 // pred_fallthru
        _
      %p287 = scmp.le.s32.totalorder 1, %s23
      %p288 = scmp.lt.s32.totalorder %s23, 5
      %p289 = pnand %p287, %p288
      %p290 = pneg %p289
      // Predicated region
      $region37: #{tpu_custom_call.1} parent=5 // pred_check
        _
      $region38: #{tpu_custom_call.1} parent=5 // pred_check_branch
        %292 = sbr.rel (%p289) target = $region40
      $region39: #{tpu_custom_call.1} parent=5 // pred_region
        %s293 = ssub.s32 %s23, 1
        %s294 = sand.u32 %s48, 1
        %s295 = scalar_lea.sflag [#allocation4], %s294
        %s296 = sand.u32 %s48, 1
        %s297 = smul.addr %s296, 8
        %s298 = scalar_lea.vmem [#allocation3], %s297
        // Predicated region
        $region41: #{tpu_custom_call.1} parent=39 // pred_check
          %p299 = pneg %p61
        $region42: #{tpu_custom_call.1} parent=39 // pred_check_branch
          %301 = sbr.rel (%p299) target = $region44
        $region43: #{tpu_custom_call.1} parent=39 // pred_region
          %302 = dma.done %s295, 128
        $region44: #{tpu_custom_call.1} parent=39 // pred_fallthru
          _
        %s303 = sand.u32 %s28, 1
        %s304 = scalar_lea.sflag [#allocation7], %s303
        %s305 = sand.u32 %s74, 1
        %s306 = smul.addr %s305, 256
        %s307 = scalar_lea.vmem [#allocation6], %s306
        // Predicated region
        $region45: #{tpu_custom_call.1} parent=39 // pred_check
          %p308 = pneg %p87
        $region46: #{tpu_custom_call.1} parent=39 // pred_check_branch
          %310 = sbr.rel (%p308) target = $region48
        $region47: #{tpu_custom_call.1} parent=39 // pred_region
          %311 = dma.done %s304, 4096
        $region48: #{tpu_custom_call.1} parent=39 // pred_fallthru
          _
        %s312 = sand.u32 %s28, 1
        %s313 = scalar_lea.sflag [#allocation7], %s312
        %s314 = sand.u32 %s100, 1
        %s315 = smul.addr %s314, 2
        %s316 = scalar_lea.vmem [#allocation8], %s315
        // Predicated region
        $region49: #{tpu_custom_call.1} parent=39 // pred_check
          %p317 = pneg %p113
        $region50: #{tpu_custom_call.1} parent=39 // pred_check_branch
          %319 = sbr.rel (%p317) target = $region52
        $region51: #{tpu_custom_call.1} parent=39 // pred_region
          %320 = dma.done %s313, 32
        $region52: #{tpu_custom_call.1} parent=39 // pred_fallthru
          _
        %s321 = sand.u32 %s126, 1
        %s322 = scalar_lea.sflag [#allocation10], %s321
        %s323 = sand.u32 %s126, 1
        %s324 = smul.addr %s323, 256
        %s325 = scalar_lea.vmem [#allocation9], %s324
        // Predicated region
        $region53: #{tpu_custom_call.1} parent=39 // pred_check
          %p326 = pneg %p139
        $region54: #{tpu_custom_call.1} parent=39 // pred_check_branch
          %328 = sbr.rel (%p326) target = $region56
        $region55: #{tpu_custom_call.1} parent=39 // pred_region
          %329 = dma.done %s322, 4096
        $region56: #{tpu_custom_call.1} parent=39 // pred_fallthru
          _
        %s330 = sand.u32 %s48, 1
        %s331 = scalar_lea.sflag [#allocation4], %s330
        %s332 = sand.u32 %s48, 1
        %s333 = smul.addr %s332, 8
        %s334 = scalar_lea.vmem [#allocation3], %s333
        %p335 = pneg %p61
        %p336 = pneg %p58
        %s337 = sand.u32 %s28, 1
        %s338 = scalar_lea.sflag [#allocation7], %s337
        %s339 = sand.u32 %s74, 1
        %s340 = smul.addr %s339, 256
        %s341 = scalar_lea.vmem [#allocation6], %s340
        %p342 = pneg %p87
        %p343 = pneg %p84
        %s344 = sand.u32 %s28, 1
        %s345 = scalar_lea.sflag [#allocation7], %s344
        %s346 = sand.u32 %s100, 1
        %s347 = smul.addr %s346, 2
        %s348 = scalar_lea.vmem [#allocation8], %s347
        %p349 = pneg %p113
        %p350 = pneg %p110
        %s351 = sand.u32 %s126, 1
        %s352 = scalar_lea.sflag [#allocation10], %s351
        %s353 = sand.u32 %s126, 1
        %s354 = smul.addr %s353, 256
        %s355 = scalar_lea.vmem [#allocation9], %s354
        %p356 = pneg %p139
        %p357 = pneg %p136
        %p358 = pneg %p160
        %p359 = pneg %p157
        %p360 = pneg %p186
        %p361 = pneg %p183
        %s362 = sand.u32 %s173, 1
        %s363 = scalar_lea.sflag [#allocation5], %s362
        %s364 = sand.u32 %s173, 1
        %s365 = smul.addr %s364, 8
        %s366 = scalar_lea.vmem [#allocation11], %s365
        %s367 = smul.u32 32, %s33
        %s368 = smul.u32 2, %s33
        %s369 = smul.u32 2, %s33
        %p370 = scmp.eq.s32.totalorder %s33, 0
        // Predicated region
        $region57: #{tpu_custom_call.1} parent=39 // pred_check
          %p371 = pneg %p370
        $region58: #{tpu_custom_call.1} parent=39 // pred_check_branch
          %373 = sbr.rel (%p371) target = $region60
        $region59: #{tpu_custom_call.1} parent=39 // pred_region
          %374 = vst [vmem:[#allocation2] sm:$0xff] 0.0
        $region60: #{tpu_custom_call.1} parent=39 // pred_fallthru
          _
        %v375 = vld [vmem:[#allocation2] sm:$0xff]
        %v376 = vld [vmem:[%s298] sm:$0xff]
        %v377 = vld [vmem:[%s307] sm:$0xff]
        %v378 = vld [vmem:[%s307 + $0x8] sm:$0xff]
        %v379 = vld [vmem:[%s307 + $0x10] sm:$0xff]
        %v380 = vld [vmem:[%s307 + $0x18] sm:$0xff]
        %v381 = vld [vmem:[%s307 + $0x20] sm:$0xff]
        %v382 = vld [vmem:[%s307 + $0x28] sm:$0xff]
        %v383 = vld [vmem:[%s307 + $0x30] sm:$0xff]
        %v384 = vld [vmem:[%s307 + $0x38] sm:$0xff]
        %v385 = vld [vmem:[%s307 + $0x40] sm:$0xff]
        %v386 = vld [vmem:[%s307 + $0x48] sm:$0xff]
        %v387 = vld [vmem:[%s307 + $0x50] sm:$0xff]
        %v388 = vld [vmem:[%s307 + $0x58] sm:$0xff]
        %v389 = vld [vmem:[%s307 + $0x60] sm:$0xff]
        %v390 = vld [vmem:[%s307 + $0x68] sm:$0xff]
        %v391 = vld [vmem:[%s307 + $0x70] sm:$0xff]
        %v392 = vld [vmem:[%s307 + $0x78] sm:$0xff]
        %v393 = vld [vmem:[%s307 + $0x80] sm:$0xff]
        %v394 = vld [vmem:[%s307 + $0x88] sm:$0xff]
        %v395 = vld [vmem:[%s307 + $0x90] sm:$0xff]
        %v396 = vld [vmem:[%s307 + $0x98] sm:$0xff]
        %v397 = vld [vmem:[%s307 + $0xa0] sm:$0xff]
        %v398 = vld [vmem:[%s307 + $0xa8] sm:$0xff]
        %v399 = vld [vmem:[%s307 + $0xb0] sm:$0xff]
        %v400 = vld [vmem:[%s307 + $0xb8] sm:$0xff]
        %v401 = vld [vmem:[%s307 + $0xc0] sm:$0xff]
        %v402 = vld [vmem:[%s307 + $0xc8] sm:$0xff]
        %v403 = vld [vmem:[%s307 + $0xd0] sm:$0xff]
        %v404 = vld [vmem:[%s307 + $0xd8] sm:$0xff]
        %v405 = vld [vmem:[%s307 + $0xe0] sm:$0xff]
        %v406 = vld [vmem:[%s307 + $0xe8] sm:$0xff]
        %v407 = vld [vmem:[%s307 + $0xf0] sm:$0xff]
        %v408 = vld [vmem:[%s307 + $0xf8] sm:$0xff]
        %v409 = vld [vmem:[%s316] sm:$0x3]
        %v411 = vlaneseq
        %v412 = vshrl.u32 %v411, 7
        %v413 = vsub.s32 0, %v412
        %v414 = vrot.slane %v409, %v413
        %v415 = vlaneseq
        %v416 = vshrl.u32 %v415, 7
        %v417 = vsub.s32 1, %v416
        %v418 = vrot.slane %v409, %v417
        %421 = vmatprep.subr.mxu0 0.0
        %422 = vmatpush1.xpose.msra.mxu0 %v392
        %423 = vmatprep.subr.mxu0 0.0
        %424 = vmatpush1.xpose.msra.mxu0 %v391
        %425 = vmatprep.subr.mxu0 0.0
        %426 = vmatpush1.xpose.msra.mxu0 %v390
        %427 = vmatprep.subr.mxu0 0.0
        %428 = vmatpush1.xpose.msra.mxu0 %v389
        %429 = vmatprep.subr.mxu0 0.0
        %430 = vmatpush1.xpose.msra.mxu0 %v388
        %431 = vmatprep.subr.mxu0 0.0
        %432 = vmatpush1.xpose.msra.mxu0 %v387
        %433 = vmatprep.subr.mxu0 0.0
        %434 = vmatpush1.xpose.msra.mxu0 %v386
        %435 = vmatprep.subr.mxu0 0.0
        %436 = vmatpush1.xpose.msra.mxu0 %v385
        %437 = vmatprep.subr.mxu0 0.0
        %438 = vmatpush1.xpose.msra.mxu0 %v384
        %439 = vmatprep.subr.mxu0 0.0
        %440 = vmatpush1.xpose.msra.mxu0 %v383
        %441 = vmatprep.subr.mxu0 0.0
        %442 = vmatpush1.xpose.msra.mxu0 %v382
        %443 = vmatprep.subr.mxu0 0.0
        %444 = vmatpush1.xpose.msra.mxu0 %v381
        %445 = vmatprep.subr.mxu0 0.0
        %446 = vmatpush1.xpose.msra.mxu0 %v380
        %447 = vmatprep.subr.mxu0 0.0
        %448 = vmatpush1.xpose.msra.mxu0 %v379
        %449 = vmatprep.subr.mxu0 0.0
        %450 = vmatpush1.xpose.msra.mxu0 %v378
        %451 = vmatprep.subr.mxu0 0.0
        %452 = vmatpush1.xpose.msra.mxu0 %v377
        %453 = vmatprep.subr.mxu0 0.0
        %454 = vmatpush2.xpose.msra.mxu0 %v408
        %455 = vmatprep.subr.mxu0 0.0
        %456 = vmatpush2.xpose.msra.mxu0 %v407
        %457 = vmatprep.subr.mxu0 0.0
        %458 = vmatpush2.xpose.msra.mxu0 %v406
        %459 = vmatprep.subr.mxu0 0.0
        %460 = vmatpush2.xpose.msra.mxu0 %v405
        %461 = vmatprep.subr.mxu0 0.0
        %462 = vmatpush2.xpose.msra.mxu0 %v404
        %463 = vmatprep.subr.mxu0 0.0
        %464 = vmatpush2.xpose.msra.mxu0 %v403
        %465 = vmatprep.subr.mxu0 0.0
        %466 = vmatpush2.xpose.msra.mxu0 %v402
        %467 = vmatprep.subr.mxu0 0.0
        %468 = vmatpush2.xpose.msra.mxu0 %v401
        %469 = vmatprep.subr.mxu0 0.0
        %470 = vmatpush2.xpose.msra.mxu0 %v400
        %471 = vmatprep.subr.mxu0 0.0
        %472 = vmatpush2.xpose.msra.mxu0 %v399
        %473 = vmatprep.subr.mxu0 0.0
        %474 = vmatpush2.xpose.msra.mxu0 %v398
        %475 = vmatprep.subr.mxu0 0.0
        %476 = vmatpush2.xpose.msra.mxu0 %v397
        %477 = vmatprep.subr.mxu0 0.0
        %478 = vmatpush2.xpose.msra.mxu0 %v396
        %479 = vmatprep.subr.mxu0 0.0
        %480 = vmatpush2.xpose.msra.mxu0 %v395
        %481 = vmatprep.subr.mxu0 0.0
        %482 = vmatpush2.xpose.msra.mxu0 %v394
        %483 = vmatprep.subr.mxu0 0.0
        %484 = vmatpush2.xpose.msra.mxu0 %v393
        %485 = vmatprep.mubr.f32.mxu0 0.0
        %486 = vmatmul.mubr.f32.gmra.mxu0 %v376
        %v487 = vpop.f32.mrf.mxu0
        %v488 = vadd.f32 %v414, %v487
        %v489 = vpop.f32.mrf.mxu0
        %v490 = vadd.f32 %v418, %v489
        %491 = vdwg.mxu0
        %v492 = vmax.f32 %v488, 0.0
        %v493 = vmax.f32 %v490, 0.0
        %v494 = vld [vmem:[%s325] sm:$0xff]
        %v495 = vld [vmem:[%s325 + $0x8] sm:$0xff]
        %v496 = vld [vmem:[%s325 + $0x10] sm:$0xff]
        %v497 = vld [vmem:[%s325 + $0x18] sm:$0xff]
        %v498 = vld [vmem:[%s325 + $0x20] sm:$0xff]
        %v499 = vld [vmem:[%s325 + $0x28] sm:$0xff]
        %v500 = vld [vmem:[%s325 + $0x30] sm:$0xff]
        %v501 = vld [vmem:[%s325 + $0x38] sm:$0xff]
        %v502 = vld [vmem:[%s325 + $0x40] sm:$0xff]
        %v503 = vld [vmem:[%s325 + $0x48] sm:$0xff]
        %v504 = vld [vmem:[%s325 + $0x50] sm:$0xff]
        %v505 = vld [vmem:[%s325 + $0x58] sm:$0xff]
        %v506 = vld [vmem:[%s325 + $0x60] sm:$0xff]
        %v507 = vld [vmem:[%s325 + $0x68] sm:$0xff]
        %v508 = vld [vmem:[%s325 + $0x70] sm:$0xff]
        %v509 = vld [vmem:[%s325 + $0x78] sm:$0xff]
        %v510 = vld [vmem:[%s325 + $0x80] sm:$0xff]
        %v511 = vld [vmem:[%s325 + $0x88] sm:$0xff]
        %v512 = vld [vmem:[%s325 + $0x90] sm:$0xff]
        %v513 = vld [vmem:[%s325 + $0x98] sm:$0xff]
        %v514 = vld [vmem:[%s325 + $0xa0] sm:$0xff]
        %v515 = vld [vmem:[%s325 + $0xa8] sm:$0xff]
        %v516 = vld [vmem:[%s325 + $0xb0] sm:$0xff]
        %v517 = vld [vmem:[%s325 + $0xb8] sm:$0xff]
        %v518 = vld [vmem:[%s325 + $0xc0] sm:$0xff]
        %v519 = vld [vmem:[%s325 + $0xc8] sm:$0xff]
        %v520 = vld [vmem:[%s325 + $0xd0] sm:$0xff]
        %v521 = vld [vmem:[%s325 + $0xd8] sm:$0xff]
        %v522 = vld [vmem:[%s325 + $0xe0] sm:$0xff]
        %v523 = vld [vmem:[%s325 + $0xe8] sm:$0xff]
        %v524 = vld [vmem:[%s325 + $0xf0] sm:$0xff]
        %v525 = vld [vmem:[%s325 + $0xf8] sm:$0xff]
        %526 = vmatprep.subr.mxu0 %v525
        %527 = vmatpush1.xpose.msra.mxu0 %v524
        %528 = vmatprep.subr.mxu0 %v523
        %529 = vmatpush1.xpose.msra.mxu0 %v522
        %530 = vmatprep.subr.mxu0 %v521
        %531 = vmatpush1.xpose.msra.mxu0 %v520
        %532 = vmatprep.subr.mxu0 %v519
        %533 = vmatpush1.xpose.msra.mxu0 %v518
        %534 = vmatprep.subr.mxu0 %v517
        %535 = vmatpush1.xpose.msra.mxu0 %v516
        %536 = vmatprep.subr.mxu0 %v515
        %537 = vmatpush1.xpose.msra.mxu0 %v514
        %538 = vmatprep.subr.mxu0 %v513
        %539 = vmatpush1.xpose.msra.mxu0 %v512
        %540 = vmatprep.subr.mxu0 %v511
        %541 = vmatpush1.xpose.msra.mxu0 %v510
        %542 = vmatprep.subr.mxu0 %v509
        %543 = vmatpush1.xpose.msra.mxu0 %v508
        %544 = vmatprep.subr.mxu0 %v507
        %545 = vmatpush1.xpose.msra.mxu0 %v506
        %546 = vmatprep.subr.mxu0 %v505
        %547 = vmatpush1.xpose.msra.mxu0 %v504
        %548 = vmatprep.subr.mxu0 %v503
        %549 = vmatpush1.xpose.msra.mxu0 %v502
        %550 = vmatprep.subr.mxu0 %v501
        %551 = vmatpush1.xpose.msra.mxu0 %v500
        %552 = vmatprep.subr.mxu0 %v499
        %553 = vmatpush1.xpose.msra.mxu0 %v498
        %554 = vmatprep.subr.mxu0 %v497
        %555 = vmatpush1.xpose.msra.mxu0 %v496
        %556 = vmatprep.subr.mxu0 %v495
        %557 = vmatpush1.xpose.msra.mxu0 %v494
        %558 = vmatprep.subr.mxu0 0.0
        %559 = vmatpush2.xpose.msra.mxu0 0.0
        %560 = vmatprep.subr.mxu0 0.0
        %561 = vmatpush2.xpose.msra.mxu0 0.0
        %562 = vmatprep.subr.mxu0 0.0
        %563 = vmatpush2.xpose.msra.mxu0 0.0
        %564 = vmatprep.subr.mxu0 0.0
        %565 = vmatpush2.xpose.msra.mxu0 0.0
        %566 = vmatprep.subr.mxu0 0.0
        %567 = vmatpush2.xpose.msra.mxu0 0.0
        %568 = vmatprep.subr.mxu0 0.0
        %569 = vmatpush2.xpose.msra.mxu0 0.0
        %570 = vmatprep.subr.mxu0 0.0
        %571 = vmatpush2.xpose.msra.mxu0 0.0
        %572 = vmatprep.subr.mxu0 0.0
        %573 = vmatpush2.xpose.msra.mxu0 0.0
        %574 = vmatprep.subr.mxu0 0.0
        %575 = vmatpush2.xpose.msra.mxu0 0.0
        %576 = vmatprep.subr.mxu0 0.0
        %577 = vmatpush2.xpose.msra.mxu0 0.0
        %578 = vmatprep.subr.mxu0 0.0
        %579 = vmatpush2.xpose.msra.mxu0 0.0
        %580 = vmatprep.subr.mxu0 0.0
        %581 = vmatpush2.xpose.msra.mxu0 0.0
        %582 = vmatprep.subr.mxu0 0.0
        %583 = vmatpush2.xpose.msra.mxu0 0.0
        %584 = vmatprep.subr.mxu0 0.0
        %585 = vmatpush2.xpose.msra.mxu0 0.0
        %586 = vmatprep.subr.mxu0 0.0
        %587 = vmatpush2.xpose.msra.mxu0 0.0
        %588 = vmatprep.subr.mxu0 0.0
        %589 = vmatpush2.xpose.msra.mxu0 0.0
        %590 = vmatprep.mubr.f32.mxu0 %v493
        %591 = vmatmul.mubr.f32.gmra.mxu0 %v492
        %v592 = vpop.f32.mrf.mxu0
        %v593 = vadd.f32 0.0, %v592
        %v594 = vpop.f32.mrf.mxu0
        %595 = vdwg.mxu0
        %v596 = vadd.f32 %v375, %v593
        %597 = vst [vmem:[#allocation2] sm:$0xff] %v596
        %p598 = scmp.eq.s32.totalorder %s33, 1
        // Predicated region
        $region61: #{tpu_custom_call.1} parent=39 // pred_check
          %p599 = pneg %p598
        $region62: #{tpu_custom_call.1} parent=39 // pred_check_branch
          %601 = sbr.rel (%p599) target = $region64
        $region63: #{tpu_custom_call.1} parent=39 // pred_region
          %v602 = vld [vmem:[#allocation2] sm:$0xff]
          %v603 = vld [vmem:[%s4] sm:$0x1]
          %v605 = vlaneseq
          %v606 = vshrl.u32 %v605, 7
          %v607 = vsub.s32 0, %v606
          %v608 = vrot.slane %v603, %v607
          %v610 = vadd.f32 %v602, %v608
          %611 = vst [vmem:[%s366] sm:$0xff] %v610
        $region64: #{tpu_custom_call.1} parent=39 // pred_fallthru
          _
        %s612 = sand.u32 %s173, 1
        %s613 = scalar_lea.sflag [#allocation5], %s612
        %s614 = sand.u32 %s173, 1
        %s615 = smul.addr %s614, 8
        %s616 = scalar_lea.vmem [#allocation11], %s615
        // Predicated region
        $region65: #{tpu_custom_call.1} parent=39 // pred_check
          %p617 = pneg %p183
        $region66: #{tpu_custom_call.1} parent=39 // pred_check_branch
          %619 = sbr.rel (%p617) target = $region68
        $region67: #{tpu_custom_call.1} parent=39 // pred_region
          %s621 = ssub.s32 128, 128
          %622 = vsyncadd %s613, %s621
          %s623 = smul.addr %s32, 128
          %s624 = scalar_lea.hbm %s5, %s623
          %s626 = sshll.u32 %s616, 4
          %s627 = int_to_ptr.vmem [resolvable:$true] %s626
          %629 = dma.vmem_to_hbm [thread:$0]  %s627, 128, %s624, %s613
        $region68: #{tpu_custom_call.1} parent=39 // pred_fallthru
          _
      $region40: #{tpu_custom_call.1} parent=5 // pred_fallthru
        _
      %p630 = scmp.le.s32.totalorder 2, %s23
      // Predicated region
      $region69: #{tpu_custom_call.1} parent=5 // pred_check
        %p631 = pneg %p630
      $region70: #{tpu_custom_call.1} parent=5 // pred_check_branch
        %633 = sbr.rel (%p631) target = $region72
      $region71: #{tpu_custom_call.1} parent=5 // pred_region
        %s634 = ssub.s32 %s23, 2
        // Predicated region
        $region73: #{tpu_custom_call.1} parent=71 // pred_check
          %p635 = pneg %p189
        $region74: #{tpu_custom_call.1} parent=71 // pred_check_branch
          %637 = sbr.rel (%p635) target = $region76
        $region75: #{tpu_custom_call.1} parent=71 // pred_region
          %s638 = sand.u32 %s174, 1
          %s639 = scalar_lea.sflag [#allocation5], %s638
          %s640 = sand.u32 %s174, 1
          %s641 = smul.addr %s640, 8
          %s642 = scalar_lea.vmem [#allocation11], %s641
          %643 = dma.done %s639, 128
        $region76: #{tpu_custom_call.1} parent=71 // pred_fallthru
          _
      $region72: #{tpu_custom_call.1} parent=5 // pred_fallthru
        _
    $region6: #{tpu_custom_call.1} parent=1 // loop_footer
      %s27 = sadd.s32 1, %s23
    $region7: #{tpu_custom_call.1} parent=1 // loop_footer_branch
      %22 = sbr.rel target = $region3
    $region8: #{tpu_custom_call.1} parent=1 // loop_exit
      _
    %644 = vsyncpa [#allocation4], 1
    %s645 = scalar_lea.sflag [#allocation4], 1
    %646 = vsyncpa %s645, 1
    %647 = vsyncpa [#allocation7], 1
    %s648 = scalar_lea.sflag [#allocation7], 1
    %649 = vsyncpa %s648, 1
    %650 = vsyncpa [#allocation10], 1
    %s651 = scalar_lea.sflag [#allocation10], 1
    %652 = vsyncpa %s651, 1
    %653 = vsyncpa [#allocation5], 1
    %s654 = scalar_lea.sflag [#allocation5], 1
    %655 = vsyncpa %s654, 1

</llo_original>
